<compile_context>
chip_gen: v7x
topology: tpu7x:2x2x1
jax: 0.10.0
libtpu: 0.0.40
codegen_flags: <defaults>
</compile_context>

<pallas_src>
import functools
import math

import jax
import jax.numpy as jnp
from jax import lax
from jax.experimental import pallas as pl
from jax.experimental.pallas import tpu as pltpu


def ghost_kernel(x_ref, w1_ref, b1_ref, wdw_ref, b2_ref, masks_ref, o_ref,
                 *, W, relu):
    """One batch-tile of whole images per grid step (flattened spatial on lanes).

    x_ref     : (NB, Cin, H*W)   input images                    (VMEM)
    w1_ref    : (Cin, Ci, 1)     1x1 conv weights * BN scale     (VMEM)
    b1_ref    : (Ci, 1)          folded BN bias, primary         (VMEM)
    wdw_ref   : (9, Ci, 1)       3x3 dw taps * BN scale, t=kh*3+kw (VMEM)
    b2_ref    : (Ci, 1)          folded BN bias, cheap           (VMEM)
    masks_ref : (4, H*W)         border masks: [w<W-1, w>=1, h<H-1, h>=1]
    o_ref     : (NB, 2*Ci, H*W)  output: [x1 | x2] along channels
    """
    NB, Cin, HW = x_ref.shape
    Ci = b1_ref.shape[0]

    # ---- hoisted small operands (shared by all images in the tile) ----------
    m = masks_ref[...].astype(jnp.float32)              # (4, HW)
    m_cl = m[0:1, :]          # valid for neighbor at w+1
    m_cr = m[1:2, :]          # valid for neighbor at w-1
    m_rd = m[2:3, :]          # valid for neighbor at h+1
    m_ru = m[3:4, :]          # valid for neighbor at h-1
    b1 = b1_ref[...]                                     # (Ci, 1)
    b2 = b2_ref[...]                                     # (Ci, 1)
    w1cols = [w1_ref[ci] for ci in range(Cin)]           # each (Ci, 1)
    wtaps = [wdw_ref[t] for t in range(9)]               # each (Ci, 1)

    for b in range(NB):
        x = x_ref[b].astype(jnp.float32)                 # (Cin, HW)

        # ---- primary_conv: 1x1 conv (BN scale folded) + bias + ReLU ---------
        acc = w1cols[0] * x[0:1, :]                      # (Ci,1)*(1,HW)->(Ci,HW)
        for ci in range(1, Cin):
            acc = acc + w1cols[ci] * x[ci:ci + 1, :]
        x1 = acc + b1
        if relu:
            x1 = jnp.maximum(x1, 0.0)                    # (Ci, HW)

        # ---- cheap_operation: depthwise 3x3 on the flattened spatial axis ---
        # Column-shifted, border-masked copies (built once):
        xl = jnp.roll(x1, -1, axis=-1) * m_cl            # x1[:, h, w+1]
        xr = jnp.roll(x1, 1, axis=-1) * m_cr             # x1[:, h, w-1]

        def row(kh):                                     # one 3-tap row combo
            return (wtaps[kh * 3 + 0] * xr
                    + wtaps[kh * 3 + 1] * x1
                    + wtaps[kh * 3 + 2] * xl)

        acc2 = row(1)                                          # dh = 0
        acc2 = acc2 + m_ru * jnp.roll(row(0), W, axis=-1)      # dh = -1
        acc2 = acc2 + m_rd * jnp.roll(row(2), -W, axis=-1)     # dh = +1
        x2 = acc2 + b2
        if relu:
            x2 = jnp.maximum(x2, 0.0)

        # ---- lane-dense stores: [x1 | x2] along the channel axis ------------
        o_ref[b, pl.ds(0, Ci), :] = x1.astype(o_ref.dtype)
        o_ref[b, pl.ds(Ci, Ci), :] = x2.astype(o_ref.dtype)


def ghost_module(x_nchw, params, oup, *, out_dtype=None, relu=True):
    """Wrapper: NCHW in, NCHW out (matches torch GhostModule.forward)."""
    w1, s1, b1, wdw, s2, b2 = params
    N, Cin, H, W = x_nchw.shape
    Ci = w1.shape[0]
    HW = H * W
    out_dtype = x_nchw.dtype if out_dtype is None else out_dtype

    # ---- fold BN scale into the conv weights; lay params out as (.., Ci, 1)
    #      columns so the kernel broadcasts them over lanes directly. ----------
    w1f = (w1 * s1[:, None]).T.reshape(Cin, Ci, 1).astype(jnp.float32)
    wdwf = (wdw * s2[:, None]).T.reshape(9, Ci, 1).astype(jnp.float32)
    b1c = b1.reshape(Ci, 1).astype(jnp.float32)
    b2c = b2.reshape(Ci, 1).astype(jnp.float32)

    # ---- precomputed multiplicative border masks for the flattened layout ----
    w_idx = jnp.tile(jnp.arange(W, dtype=jnp.int32), H)
    h_idx = jnp.repeat(jnp.arange(H, dtype=jnp.int32), W)
    masks = jnp.stack([w_idx < W - 1, w_idx >= 1,
                       h_idx < H - 1, h_idx >= 1]).astype(jnp.float32)  # (4,HW)

    # ---- free view: spatial flattened onto the lane axis ---------------------
    x_flat = x_nchw.reshape(N, Cin, HW)

    # ---- collapse the grid for small problems (overhead-bound otherwise) -----
    per_img_bytes = (Cin + 2 * Ci) * HW * 4
    nb = 1
    for cand in (8, 4, 2):
        if N % cand == 0 and cand * per_img_bytes <= (2 << 20):
            nb = cand
            break
    grid = (N // nb,)

    kernel = functools.partial(ghost_kernel, W=W, relu=relu)

    out = pl.pallas_call(
        kernel,
        out_shape=jax.ShapeDtypeStruct((N, 2 * Ci, HW), out_dtype),
        grid_spec=pltpu.PrefetchScalarGridSpec(
            num_scalar_prefetch=0,
            grid=grid,
            in_specs=[
                pl.BlockSpec((nb, Cin, HW), lambda g: (g, 0, 0)),   # x
                pl.BlockSpec((Cin, Ci, 1), lambda g: (0, 0, 0)),    # w1*s1
                pl.BlockSpec((Ci, 1), lambda g: (0, 0)),            # b1
                pl.BlockSpec((9, Ci, 1), lambda g: (0, 0, 0)),      # wdw*s2
                pl.BlockSpec((Ci, 1), lambda g: (0, 0)),            # b2
                pl.BlockSpec((4, HW), lambda g: (0, 0)),            # masks
            ],
            out_specs=pl.BlockSpec((nb, 2 * Ci, HW), lambda g: (g, 0, 0)),
        ),
        compiler_params=pltpu.CompilerParams(
            dimension_semantics=("parallel",)),
    )(x_flat, w1f, b1c, wdwf, b2c, masks)

    out = out.reshape(N, 2 * Ci, H, W)
    if oup != 2 * Ci:
        out = out[:, :oup]      # torch [:, :oup]; no-op for ratio=2, even oup
    return out


def init_params(key, inp, oup, ratio=2, eps=1e-5):
    """Deterministic synthetic parameters; BN folded into (scale, bias)."""
    init_channels = math.ceil(oup / ratio)
    new_channels = init_channels * (ratio - 1)
    # Kernel implements the ratio=2 path (one depthwise output per input chan).
    assert new_channels == init_channels, "kernel supports ratio=2"

    ks = jax.random.split(key, 9)
    w1 = jax.random.normal(ks[0], (init_channels, inp), jnp.float32) * 0.3
    g1 = 1.0 + 0.1 * jax.random.normal(ks[1], (init_channels,), jnp.float32)
    be1 = 0.1 * jax.random.normal(ks[2], (init_channels,), jnp.float32)
    m1 = 0.1 * jax.random.normal(ks[3], (init_channels,), jnp.float32)
    v1 = 0.9 + 0.1 * jnp.abs(jax.random.normal(ks[4], (init_channels,), jnp.float32))

    wdw = jax.random.normal(ks[5], (init_channels, 3, 3), jnp.float32) * 0.3
    g2 = 1.0 + 0.1 * jax.random.normal(ks[6], (init_channels,), jnp.float32)
    be2 = 0.1 * jax.random.normal(ks[7], (init_channels,), jnp.float32)
    m2 = 0.0 * be2
    v2 = 0.9 + 0.1 * jnp.abs(jax.random.normal(ks[8], (init_channels,), jnp.float32))

    s1 = g1 / jnp.sqrt(v1 + eps)
    b1 = be1 - m1 * s1
    s2 = g2 / jnp.sqrt(v2 + eps)
    b2 = be2 - m2 * s2

    return (w1, s1, b1, wdw.reshape(init_channels, 9), s2, b2)


def ref_ghost(x, params, oup):
    """Pure-JAX reference (mirrors torch ops) for a correctness check."""
    w1, s1, b1, wdw, s2, b2 = params
    Ci, Cin = w1.shape
    w1_oihw = w1.reshape(Ci, Cin, 1, 1)
    y = lax.conv_general_dilated(x, w1_oihw, (1, 1), [(0, 0), (0, 0)],
                                 dimension_numbers=("NCHW", "OIHW", "NCHW"))
    x1 = jnp.maximum(y * s1.reshape(1, Ci, 1, 1) + b1.reshape(1, Ci, 1, 1), 0.0)
    wdw_oihw = wdw.reshape(Ci, 1, 3, 3)
    y2 = lax.conv_general_dilated(x1, wdw_oihw, (1, 1), [(1, 1), (1, 1)],
                                  dimension_numbers=("NCHW", "OIHW", "NCHW"),
                                  feature_group_count=Ci)
    x2 = jnp.maximum(y2 * s2.reshape(1, Ci, 1, 1) + b2.reshape(1, Ci, 1, 1), 0.0)
    return jnp.concatenate([x1, x2], axis=1)[:, :oup]


if __name__ == "__main__":
    key = jax.random.PRNGKey(0)
    k_x, k_p = jax.random.split(key)

    N, inp, H, W = 2, 4, 16, 16
    oup = 8                                # init_channels = 4, new_channels = 4

    x = jax.random.normal(k_x, (N, inp, H, W), jnp.float32)
    params = init_params(k_p, inp, oup)

    out = ghost_module(x, params, oup)
    out = jax.block_until_ready(out)

    assert out.shape == (N, oup, H, W), out.shape

    ref = jax.block_until_ready(ref_ghost(x, params, oup))
    assert jnp.allclose(out, ref, atol=1e-4, rtol=1e-4), (
        float(jnp.max(jnp.abs(out - ref))))

    print("KERNEL_OK")
</pallas_src>

<mosaic_0001>
module attributes {stable_mosaic.version = 11 : i64} {
  func.func @ghost_kernel(%arg0: i32, %arg1: memref<2x4x256xf32, #tpu.memory_space<vmem>>, %arg2: memref<4x4x1xf32, #tpu.memory_space<vmem>>, %arg3: memref<4x1xf32, #tpu.memory_space<vmem>>, %arg4: memref<9x4x1xf32, #tpu.memory_space<vmem>>, %arg5: memref<4x1xf32, #tpu.memory_space<vmem>>, %arg6: memref<4x256xf32, #tpu.memory_space<vmem>>, %arg7: memref<2x8x256xf32, #tpu.memory_space<vmem>>) attributes {dimension_semantics = [#tpu.dimension_semantics<parallel>], iteration_bounds = array<i64: 1>, scalar_prefetch = 0 : i64, scratch_operands = 0 : i64, tpu.core_type = #tpu.core_type<tc>, window_params = [{transform_indices = @transform_0, window_bounds = array<i64: 2, 4, 256>}, {pipeline_mode = #tpu.pipeline_mode<synchronous>, transform_indices = @transform_1, window_bounds = array<i64: 4, 4, 1>}, {pipeline_mode = #tpu.pipeline_mode<synchronous>, transform_indices = @transform_2, window_bounds = array<i64: 4, 1>}, {pipeline_mode = #tpu.pipeline_mode<synchronous>, transform_indices = @transform_3, window_bounds = array<i64: 9, 4, 1>}, {pipeline_mode = #tpu.pipeline_mode<synchronous>, transform_indices = @transform_4, window_bounds = array<i64: 4, 1>}, {pipeline_mode = #tpu.pipeline_mode<synchronous>, transform_indices = @transform_5, window_bounds = array<i64: 4, 256>}, {transform_indices = @transform_6, window_bounds = array<i64: 2, 8, 256>}]} {
    %c0 = arith.constant 0 : index
    %c0_0 = arith.constant 0 : index
    %0 = vector.load %arg6[%c0, %c0_0] : memref<4x256xf32, #tpu.memory_space<vmem>>, vector<4x256xf32>
    %1 = vector.extract_strided_slice %0 {offsets = [0, 0], sizes = [1, 256], strides = [1, 1]} : vector<4x256xf32> to vector<1x256xf32>
    %2 = vector.extract_strided_slice %0 {offsets = [1, 0], sizes = [1, 256], strides = [1, 1]} : vector<4x256xf32> to vector<1x256xf32>
    %3 = vector.extract_strided_slice %0 {offsets = [2, 0], sizes = [1, 256], strides = [1, 1]} : vector<4x256xf32> to vector<1x256xf32>
    %4 = vector.extract_strided_slice %0 {offsets = [3, 0], sizes = [1, 256], strides = [1, 1]} : vector<4x256xf32> to vector<1x256xf32>
    %c0_1 = arith.constant 0 : index
    %c0_2 = arith.constant 0 : index
    %5 = vector.load %arg3[%c0_1, %c0_2] : memref<4x1xf32, #tpu.memory_space<vmem>>, vector<4x1xf32>
    %c0_3 = arith.constant 0 : index
    %c0_4 = arith.constant 0 : index
    %6 = vector.load %arg5[%c0_3, %c0_4] : memref<4x1xf32, #tpu.memory_space<vmem>>, vector<4x1xf32>
    %c0_5 = arith.constant 0 : index
    %c0_6 = arith.constant 0 : index
    %c0_7 = arith.constant 0 : index
    %7 = vector.load %arg2[%c0_5, %c0_6, %c0_7] : memref<4x4x1xf32, #tpu.memory_space<vmem>>, vector<1x4x1xf32>
    %8 = vector.shape_cast %7 : vector<1x4x1xf32> to vector<4x1xf32>
    %c1 = arith.constant 1 : index
    %c0_8 = arith.constant 0 : index
    %c0_9 = arith.constant 0 : index
    %9 = vector.load %arg2[%c1, %c0_8, %c0_9] : memref<4x4x1xf32, #tpu.memory_space<vmem>>, vector<1x4x1xf32>
    %10 = vector.shape_cast %9 : vector<1x4x1xf32> to vector<4x1xf32>
    %c2 = arith.constant 2 : index
    %c0_10 = arith.constant 0 : index
    %c0_11 = arith.constant 0 : index
    %11 = vector.load %arg2[%c2, %c0_10, %c0_11] : memref<4x4x1xf32, #tpu.memory_space<vmem>>, vector<1x4x1xf32>
    %12 = vector.shape_cast %11 : vector<1x4x1xf32> to vector<4x1xf32>
    %c3 = arith.constant 3 : index
    %c0_12 = arith.constant 0 : index
    %c0_13 = arith.constant 0 : index
    %13 = vector.load %arg2[%c3, %c0_12, %c0_13] : memref<4x4x1xf32, #tpu.memory_space<vmem>>, vector<1x4x1xf32>
    %14 = vector.shape_cast %13 : vector<1x4x1xf32> to vector<4x1xf32>
    %c0_14 = arith.constant 0 : index
    %c0_15 = arith.constant 0 : index
    %c0_16 = arith.constant 0 : index
    %15 = vector.load %arg4[%c0_14, %c0_15, %c0_16] : memref<9x4x1xf32, #tpu.memory_space<vmem>>, vector<1x4x1xf32>
    %16 = vector.shape_cast %15 : vector<1x4x1xf32> to vector<4x1xf32>
    %c1_17 = arith.constant 1 : index
    %c0_18 = arith.constant 0 : index
    %c0_19 = arith.constant 0 : index
    %17 = vector.load %arg4[%c1_17, %c0_18, %c0_19] : memref<9x4x1xf32, #tpu.memory_space<vmem>>, vector<1x4x1xf32>
    %18 = vector.shape_cast %17 : vector<1x4x1xf32> to vector<4x1xf32>
    %c2_20 = arith.constant 2 : index
    %c0_21 = arith.constant 0 : index
    %c0_22 = arith.constant 0 : index
    %19 = vector.load %arg4[%c2_20, %c0_21, %c0_22] : memref<9x4x1xf32, #tpu.memory_space<vmem>>, vector<1x4x1xf32>
    %20 = vector.shape_cast %19 : vector<1x4x1xf32> to vector<4x1xf32>
    %c3_23 = arith.constant 3 : index
    %c0_24 = arith.constant 0 : index
    %c0_25 = arith.constant 0 : index
    %21 = vector.load %arg4[%c3_23, %c0_24, %c0_25] : memref<9x4x1xf32, #tpu.memory_space<vmem>>, vector<1x4x1xf32>
    %22 = vector.shape_cast %21 : vector<1x4x1xf32> to vector<4x1xf32>
    %c4 = arith.constant 4 : index
    %c0_26 = arith.constant 0 : index
    %c0_27 = arith.constant 0 : index
    %23 = vector.load %arg4[%c4, %c0_26, %c0_27] : memref<9x4x1xf32, #tpu.memory_space<vmem>>, vector<1x4x1xf32>
    %24 = vector.shape_cast %23 : vector<1x4x1xf32> to vector<4x1xf32>
    %c5 = arith.constant 5 : index
    %c0_28 = arith.constant 0 : index
    %c0_29 = arith.constant 0 : index
    %25 = vector.load %arg4[%c5, %c0_28, %c0_29] : memref<9x4x1xf32, #tpu.memory_space<vmem>>, vector<1x4x1xf32>
    %26 = vector.shape_cast %25 : vector<1x4x1xf32> to vector<4x1xf32>
    %c6 = arith.constant 6 : index
    %c0_30 = arith.constant 0 : index
    %c0_31 = arith.constant 0 : index
    %27 = vector.load %arg4[%c6, %c0_30, %c0_31] : memref<9x4x1xf32, #tpu.memory_space<vmem>>, vector<1x4x1xf32>
    %28 = vector.shape_cast %27 : vector<1x4x1xf32> to vector<4x1xf32>
    %c7 = arith.constant 7 : index
    %c0_32 = arith.constant 0 : index
    %c0_33 = arith.constant 0 : index
    %29 = vector.load %arg4[%c7, %c0_32, %c0_33] : memref<9x4x1xf32, #tpu.memory_space<vmem>>, vector<1x4x1xf32>
    %30 = vector.shape_cast %29 : vector<1x4x1xf32> to vector<4x1xf32>
    %c8 = arith.constant 8 : index
    %c0_34 = arith.constant 0 : index
    %c0_35 = arith.constant 0 : index
    %31 = vector.load %arg4[%c8, %c0_34, %c0_35] : memref<9x4x1xf32, #tpu.memory_space<vmem>>, vector<1x4x1xf32>
    %32 = vector.shape_cast %31 : vector<1x4x1xf32> to vector<4x1xf32>
    %c0_36 = arith.constant 0 : index
    %c0_37 = arith.constant 0 : index
    %c0_38 = arith.constant 0 : index
    %33 = vector.load %arg1[%c0_36, %c0_37, %c0_38] : memref<2x4x256xf32, #tpu.memory_space<vmem>>, vector<1x4x256xf32>
    %34 = vector.shape_cast %33 : vector<1x4x256xf32> to vector<4x256xf32>
    %35 = vector.extract_strided_slice %34 {offsets = [0, 0], sizes = [1, 256], strides = [1, 1]} : vector<4x256xf32> to vector<1x256xf32>
    %36 = vector.broadcast %8 : vector<4x1xf32> to vector<4x256xf32>
    %37 = vector.broadcast %35 : vector<1x256xf32> to vector<4x256xf32>
    %38 = arith.mulf %36, %37 : vector<4x256xf32>
    %39 = vector.extract_strided_slice %34 {offsets = [1, 0], sizes = [1, 256], strides = [1, 1]} : vector<4x256xf32> to vector<1x256xf32>
    %40 = vector.broadcast %10 : vector<4x1xf32> to vector<4x256xf32>
    %41 = vector.broadcast %39 : vector<1x256xf32> to vector<4x256xf32>
    %42 = arith.mulf %40, %41 : vector<4x256xf32>
    %43 = arith.addf %38, %42 : vector<4x256xf32>
    %44 = vector.extract_strided_slice %34 {offsets = [2, 0], sizes = [1, 256], strides = [1, 1]} : vector<4x256xf32> to vector<1x256xf32>
    %45 = vector.broadcast %12 : vector<4x1xf32> to vector<4x256xf32>
    %46 = vector.broadcast %44 : vector<1x256xf32> to vector<4x256xf32>
    %47 = arith.mulf %45, %46 : vector<4x256xf32>
    %48 = arith.addf %43, %47 : vector<4x256xf32>
    %49 = vector.extract_strided_slice %34 {offsets = [3, 0], sizes = [1, 256], strides = [1, 1]} : vector<4x256xf32> to vector<1x256xf32>
    %50 = vector.broadcast %14 : vector<4x1xf32> to vector<4x256xf32>
    %51 = vector.broadcast %49 : vector<1x256xf32> to vector<4x256xf32>
    %52 = arith.mulf %50, %51 : vector<4x256xf32>
    %53 = arith.addf %48, %52 : vector<4x256xf32>
    %54 = vector.broadcast %5 : vector<4x1xf32> to vector<4x256xf32>
    %55 = arith.addf %53, %54 : vector<4x256xf32>
    %cst = arith.constant 0.000000e+00 : f32
    %56 = vector.broadcast %cst : f32 to vector<4x256xf32>
    %57 = arith.maximumf %55, %56 : vector<4x256xf32>
    %58 = vector.extract_strided_slice %57 {offsets = [0, 1], sizes = [4, 255], strides = [1, 1]} : vector<4x256xf32> to vector<4x255xf32>
    %59 = vector.extract_strided_slice %57 {offsets = [0, 0], sizes = [4, 1], strides = [1, 1]} : vector<4x256xf32> to vector<4x1xf32>
    %60 = tpu.concatenate %58, %59 in 1 : vector<4x255xf32>, vector<4x1xf32> -> vector<4x256xf32>
    %61 = vector.broadcast %1 : vector<1x256xf32> to vector<4x256xf32>
    %62 = arith.mulf %60, %61 : vector<4x256xf32>
    %63 = vector.extract_strided_slice %57 {offsets = [0, 255], sizes = [4, 1], strides = [1, 1]} : vector<4x256xf32> to vector<4x1xf32>
    %64 = vector.extract_strided_slice %57 {offsets = [0, 0], sizes = [4, 255], strides = [1, 1]} : vector<4x256xf32> to vector<4x255xf32>
    %65 = tpu.concatenate %63, %64 in 1 : vector<4x1xf32>, vector<4x255xf32> -> vector<4x256xf32>
    %66 = vector.broadcast %2 : vector<1x256xf32> to vector<4x256xf32>
    %67 = arith.mulf %65, %66 : vector<4x256xf32>
    %68 = vector.broadcast %22 : vector<4x1xf32> to vector<4x256xf32>
    %69 = arith.mulf %68, %67 : vector<4x256xf32>
    %70 = vector.broadcast %24 : vector<4x1xf32> to vector<4x256xf32>
    %71 = arith.mulf %70, %57 : vector<4x256xf32>
    %72 = arith.addf %69, %71 : vector<4x256xf32>
    %73 = vector.broadcast %26 : vector<4x1xf32> to vector<4x256xf32>
    %74 = arith.mulf %73, %62 : vector<4x256xf32>
    %75 = arith.addf %72, %74 : vector<4x256xf32>
    %76 = vector.broadcast %16 : vector<4x1xf32> to vector<4x256xf32>
    %77 = arith.mulf %76, %67 : vector<4x256xf32>
    %78 = vector.broadcast %18 : vector<4x1xf32> to vector<4x256xf32>
    %79 = arith.mulf %78, %57 : vector<4x256xf32>
    %80 = arith.addf %77, %79 : vector<4x256xf32>
    %81 = vector.broadcast %20 : vector<4x1xf32> to vector<4x256xf32>
    %82 = arith.mulf %81, %62 : vector<4x256xf32>
    %83 = arith.addf %80, %82 : vector<4x256xf32>
    %84 = vector.extract_strided_slice %83 {offsets = [0, 240], sizes = [4, 16], strides = [1, 1]} : vector<4x256xf32> to vector<4x16xf32>
    %85 = vector.extract_strided_slice %83 {offsets = [0, 0], sizes = [4, 240], strides = [1, 1]} : vector<4x256xf32> to vector<4x240xf32>
    %86 = tpu.concatenate %84, %85 in 1 : vector<4x16xf32>, vector<4x240xf32> -> vector<4x256xf32>
    %87 = vector.broadcast %4 : vector<1x256xf32> to vector<4x256xf32>
    %88 = arith.mulf %87, %86 : vector<4x256xf32>
    %89 = arith.addf %75, %88 : vector<4x256xf32>
    %90 = vector.broadcast %28 : vector<4x1xf32> to vector<4x256xf32>
    %91 = arith.mulf %90, %67 : vector<4x256xf32>
    %92 = vector.broadcast %30 : vector<4x1xf32> to vector<4x256xf32>
    %93 = arith.mulf %92, %57 : vector<4x256xf32>
    %94 = arith.addf %91, %93 : vector<4x256xf32>
    %95 = vector.broadcast %32 : vector<4x1xf32> to vector<4x256xf32>
    %96 = arith.mulf %95, %62 : vector<4x256xf32>
    %97 = arith.addf %94, %96 : vector<4x256xf32>
    %98 = vector.extract_strided_slice %97 {offsets = [0, 16], sizes = [4, 240], strides = [1, 1]} : vector<4x256xf32> to vector<4x240xf32>
    %99 = vector.extract_strided_slice %97 {offsets = [0, 0], sizes = [4, 16], strides = [1, 1]} : vector<4x256xf32> to vector<4x16xf32>
    %100 = tpu.concatenate %98, %99 in 1 : vector<4x240xf32>, vector<4x16xf32> -> vector<4x256xf32>
    %101 = vector.broadcast %3 : vector<1x256xf32> to vector<4x256xf32>
    %102 = arith.mulf %101, %100 : vector<4x256xf32>
    %103 = arith.addf %89, %102 : vector<4x256xf32>
    %104 = vector.broadcast %6 : vector<4x1xf32> to vector<4x256xf32>
    %105 = arith.addf %103, %104 : vector<4x256xf32>
    %cst_39 = arith.constant 0.000000e+00 : f32
    %106 = vector.broadcast %cst_39 : f32 to vector<4x256xf32>
    %107 = arith.maximumf %105, %106 : vector<4x256xf32>
    %c0_40 = arith.constant 0 : index
    %c0_41 = arith.constant 0 : index
    %c0_42 = arith.constant 0 : index
    %108 = vector.load %arg7[%c0_40, %c0_41, %c0_42] : memref<2x8x256xf32, #tpu.memory_space<vmem>>, vector<1x4x256xf32>
    %109 = vector.shape_cast %108 : vector<1x4x256xf32> to vector<4x256xf32>
    %110 = vector.shape_cast %57 : vector<4x256xf32> to vector<1x4x256xf32>
    tpu.vector_store %arg7[%c0_40, %c0_41, %c0_42], %110 {strides = array<i32>} : memref<2x8x256xf32, #tpu.memory_space<vmem>>, vector<1x4x256xf32>,
    %c0_43 = arith.constant 0 : index
    %c4_44 = arith.constant 4 : index
    %c0_45 = arith.constant 0 : index
    %111 = vector.load %arg7[%c0_43, %c4_44, %c0_45] : memref<2x8x256xf32, #tpu.memory_space<vmem>>, vector<1x4x256xf32>
    %112 = vector.shape_cast %111 : vector<1x4x256xf32> to vector<4x256xf32>
    %113 = vector.shape_cast %107 : vector<4x256xf32> to vector<1x4x256xf32>
    tpu.vector_store %arg7[%c0_43, %c4_44, %c0_45], %113 {strides = array<i32>} : memref<2x8x256xf32, #tpu.memory_space<vmem>>, vector<1x4x256xf32>,
    %c1_46 = arith.constant 1 : index
    %c0_47 = arith.constant 0 : index
    %c0_48 = arith.constant 0 : index
    %114 = vector.load %arg1[%c1_46, %c0_47, %c0_48] : memref<2x4x256xf32, #tpu.memory_space<vmem>>, vector<1x4x256xf32>
    %115 = vector.shape_cast %114 : vector<1x4x256xf32> to vector<4x256xf32>
    %116 = vector.extract_strided_slice %115 {offsets = [0, 0], sizes = [1, 256], strides = [1, 1]} : vector<4x256xf32> to vector<1x256xf32>
    %117 = vector.broadcast %8 : vector<4x1xf32> to vector<4x256xf32>
    %118 = vector.broadcast %116 : vector<1x256xf32> to vector<4x256xf32>
    %119 = arith.mulf %117, %118 : vector<4x256xf32>
    %120 = vector.extract_strided_slice %115 {offsets = [1, 0], sizes = [1, 256], strides = [1, 1]} : vector<4x256xf32> to vector<1x256xf32>
    %121 = vector.broadcast %10 : vector<4x1xf32> to vector<4x256xf32>
    %122 = vector.broadcast %120 : vector<1x256xf32> to vector<4x256xf32>
    %123 = arith.mulf %121, %122 : vector<4x256xf32>
    %124 = arith.addf %119, %123 : vector<4x256xf32>
    %125 = vector.extract_strided_slice %115 {offsets = [2, 0], sizes = [1, 256], strides = [1, 1]} : vector<4x256xf32> to vector<1x256xf32>
    %126 = vector.broadcast %12 : vector<4x1xf32> to vector<4x256xf32>
    %127 = vector.broadcast %125 : vector<1x256xf32> to vector<4x256xf32>
    %128 = arith.mulf %126, %127 : vector<4x256xf32>
    %129 = arith.addf %124, %128 : vector<4x256xf32>
    %130 = vector.extract_strided_slice %115 {offsets = [3, 0], sizes = [1, 256], strides = [1, 1]} : vector<4x256xf32> to vector<1x256xf32>
    %131 = vector.broadcast %14 : vector<4x1xf32> to vector<4x256xf32>
    %132 = vector.broadcast %130 : vector<1x256xf32> to vector<4x256xf32>
    %133 = arith.mulf %131, %132 : vector<4x256xf32>
    %134 = arith.addf %129, %133 : vector<4x256xf32>
    %135 = vector.broadcast %5 : vector<4x1xf32> to vector<4x256xf32>
    %136 = arith.addf %134, %135 : vector<4x256xf32>
    %cst_49 = arith.constant 0.000000e+00 : f32
    %137 = vector.broadcast %cst_49 : f32 to vector<4x256xf32>
    %138 = arith.maximumf %136, %137 : vector<4x256xf32>
    %139 = vector.extract_strided_slice %138 {offsets = [0, 1], sizes = [4, 255], strides = [1, 1]} : vector<4x256xf32> to vector<4x255xf32>
    %140 = vector.extract_strided_slice %138 {offsets = [0, 0], sizes = [4, 1], strides = [1, 1]} : vector<4x256xf32> to vector<4x1xf32>
    %141 = tpu.concatenate %139, %140 in 1 : vector<4x255xf32>, vector<4x1xf32> -> vector<4x256xf32>
    %142 = vector.broadcast %1 : vector<1x256xf32> to vector<4x256xf32>
    %143 = arith.mulf %141, %142 : vector<4x256xf32>
    %144 = vector.extract_strided_slice %138 {offsets = [0, 255], sizes = [4, 1], strides = [1, 1]} : vector<4x256xf32> to vector<4x1xf32>
    %145 = vector.extract_strided_slice %138 {offsets = [0, 0], sizes = [4, 255], strides = [1, 1]} : vector<4x256xf32> to vector<4x255xf32>
    %146 = tpu.concatenate %144, %145 in 1 : vector<4x1xf32>, vector<4x255xf32> -> vector<4x256xf32>
    %147 = vector.broadcast %2 : vector<1x256xf32> to vector<4x256xf32>
    %148 = arith.mulf %146, %147 : vector<4x256xf32>
    %149 = vector.broadcast %22 : vector<4x1xf32> to vector<4x256xf32>
    %150 = arith.mulf %149, %148 : vector<4x256xf32>
    %151 = vector.broadcast %24 : vector<4x1xf32> to vector<4x256xf32>
    %152 = arith.mulf %151, %138 : vector<4x256xf32>
    %153 = arith.addf %150, %152 : vector<4x256xf32>
    %154 = vector.broadcast %26 : vector<4x1xf32> to vector<4x256xf32>
    %155 = arith.mulf %154, %143 : vector<4x256xf32>
    %156 = arith.addf %153, %155 : vector<4x256xf32>
    %157 = vector.broadcast %16 : vector<4x1xf32> to vector<4x256xf32>
    %158 = arith.mulf %157, %148 : vector<4x256xf32>
    %159 = vector.broadcast %18 : vector<4x1xf32> to vector<4x256xf32>
    %160 = arith.mulf %159, %138 : vector<4x256xf32>
    %161 = arith.addf %158, %160 : vector<4x256xf32>
    %162 = vector.broadcast %20 : vector<4x1xf32> to vector<4x256xf32>
    %163 = arith.mulf %162, %143 : vector<4x256xf32>
    %164 = arith.addf %161, %163 : vector<4x256xf32>
    %165 = vector.extract_strided_slice %164 {offsets = [0, 240], sizes = [4, 16], strides = [1, 1]} : vector<4x256xf32> to vector<4x16xf32>
    %166 = vector.extract_strided_slice %164 {offsets = [0, 0], sizes = [4, 240], strides = [1, 1]} : vector<4x256xf32> to vector<4x240xf32>
    %167 = tpu.concatenate %165, %166 in 1 : vector<4x16xf32>, vector<4x240xf32> -> vector<4x256xf32>
    %168 = vector.broadcast %4 : vector<1x256xf32> to vector<4x256xf32>
    %169 = arith.mulf %168, %167 : vector<4x256xf32>
    %170 = arith.addf %156, %169 : vector<4x256xf32>
    %171 = vector.broadcast %28 : vector<4x1xf32> to vector<4x256xf32>
    %172 = arith.mulf %171, %148 : vector<4x256xf32>
    %173 = vector.broadcast %30 : vector<4x1xf32> to vector<4x256xf32>
    %174 = arith.mulf %173, %138 : vector<4x256xf32>
    %175 = arith.addf %172, %174 : vector<4x256xf32>
    %176 = vector.broadcast %32 : vector<4x1xf32> to vector<4x256xf32>
    %177 = arith.mulf %176, %143 : vector<4x256xf32>
    %178 = arith.addf %175, %177 : vector<4x256xf32>
    %179 = vector.extract_strided_slice %178 {offsets = [0, 16], sizes = [4, 240], strides = [1, 1]} : vector<4x256xf32> to vector<4x240xf32>
    %180 = vector.extract_strided_slice %178 {offsets = [0, 0], sizes = [4, 16], strides = [1, 1]} : vector<4x256xf32> to vector<4x16xf32>
    %181 = tpu.concatenate %179, %180 in 1 : vector<4x240xf32>, vector<4x16xf32> -> vector<4x256xf32>
    %182 = vector.broadcast %3 : vector<1x256xf32> to vector<4x256xf32>
    %183 = arith.mulf %182, %181 : vector<4x256xf32>
    %184 = arith.addf %170, %183 : vector<4x256xf32>
    %185 = vector.broadcast %6 : vector<4x1xf32> to vector<4x256xf32>
    %186 = arith.addf %184, %185 : vector<4x256xf32>
    %cst_50 = arith.constant 0.000000e+00 : f32
    %187 = vector.broadcast %cst_50 : f32 to vector<4x256xf32>
    %188 = arith.maximumf %186, %187 : vector<4x256xf32>
    %c1_51 = arith.constant 1 : index
    %c0_52 = arith.constant 0 : index
    %c0_53 = arith.constant 0 : index
    %189 = vector.load %arg7[%c1_51, %c0_52, %c0_53] : memref<2x8x256xf32, #tpu.memory_space<vmem>>, vector<1x4x256xf32>
    %190 = vector.shape_cast %189 : vector<1x4x256xf32> to vector<4x256xf32>
    %191 = vector.shape_cast %138 : vector<4x256xf32> to vector<1x4x256xf32>
    tpu.vector_store %arg7[%c1_51, %c0_52, %c0_53], %191 {strides = array<i32>} : memref<2x8x256xf32, #tpu.memory_space<vmem>>, vector<1x4x256xf32>,
    %c1_54 = arith.constant 1 : index
    %c4_55 = arith.constant 4 : index
    %c0_56 = arith.constant 0 : index
    %192 = vector.load %arg7[%c1_54, %c4_55, %c0_56] : memref<2x8x256xf32, #tpu.memory_space<vmem>>, vector<1x4x256xf32>
    %193 = vector.shape_cast %192 : vector<1x4x256xf32> to vector<4x256xf32>
    %194 = vector.shape_cast %188 : vector<4x256xf32> to vector<1x4x256xf32>
    tpu.vector_store %arg7[%c1_54, %c4_55, %c0_56], %194 {strides = array<i32>} : memref<2x8x256xf32, #tpu.memory_space<vmem>>, vector<1x4x256xf32>,
    return
  }
  func.func @transform_0(%arg0: i32) -> (i32, i32, i32) {
    %c0_i32 = arith.constant 0 : i32
    %c0_i32_0 = arith.constant 0 : i32
    %c0_i32_1 = arith.constant 0 : i32
    return %arg0, %c0_i32, %c0_i32_0 : i32, i32, i32
  }
  func.func @transform_1(%arg0: i32) -> (i32, i32, i32) {
    %c0_i32 = arith.constant 0 : i32
    %c0_i32_0 = arith.constant 0 : i32
    %c0_i32_1 = arith.constant 0 : i32
    %c0_i32_2 = arith.constant 0 : i32
    return %c0_i32, %c0_i32_0, %c0_i32_1 : i32, i32, i32
  }
  func.func @transform_2(%arg0: i32) -> (i32, i32) {
    %c0_i32 = arith.constant 0 : i32
    %c0_i32_0 = arith.constant 0 : i32
    %c0_i32_1 = arith.constant 0 : i32
    return %c0_i32, %c0_i32_0 : i32, i32
  }
  func.func @transform_3(%arg0: i32) -> (i32, i32, i32) {
    %c0_i32 = arith.constant 0 : i32
    %c0_i32_0 = arith.constant 0 : i32
    %c0_i32_1 = arith.constant 0 : i32
    %c0_i32_2 = arith.constant 0 : i32
    return %c0_i32, %c0_i32_0, %c0_i32_1 : i32, i32, i32
  }
  func.func @transform_4(%arg0: i32) -> (i32, i32) {
    %c0_i32 = arith.constant 0 : i32
    %c0_i32_0 = arith.constant 0 : i32
    %c0_i32_1 = arith.constant 0 : i32
    return %c0_i32, %c0_i32_0 : i32, i32
  }
  func.func @transform_5(%arg0: i32) -> (i32, i32) {
    %c0_i32 = arith.constant 0 : i32
    %c0_i32_0 = arith.constant 0 : i32
    %c0_i32_1 = arith.constant 0 : i32
    return %c0_i32, %c0_i32_0 : i32, i32
  }
  func.func @transform_6(%arg0: i32) -> (i32, i32, i32) {
    %c0_i32 = arith.constant 0 : i32
    %c0_i32_0 = arith.constant 0 : i32
    %c0_i32_1 = arith.constant 0 : i32
    return %arg0, %c0_i32, %c0_i32_0 : i32, i32, i32
  }
}

</mosaic_0001>

<llo_original>
// kernel: tpu_custom_call.1
$region0: #{tpu_custom_call.1}
  #allocation0 [shape = 'u32[]', space=smem, size = 0x4, offset = 0x4, fixed_abs, tag = 'smem constant byte address 0x4 - core index']
  #allocation1 [shape = 'u32[144,128]{1,0:T(1,128)}', space=vmem, size = 0x12000, scoped, tag = 'internal scratch']
  %s0 = inlined_call_operand.vmem [shape: f32[2,4,256], index: 0, kind: input, shape index: {}]
  %s1 = inlined_call_operand.vmem [shape: f32[4,4,1], index: 1, kind: input, shape index: {}]
  %s2 = inlined_call_operand.vmem [shape: f32[4,1], index: 2, kind: input, shape index: {}]
  %s3 = inlined_call_operand.vmem [shape: f32[9,4,1], index: 3, kind: input, shape index: {}]
  %s4 = inlined_call_operand.vmem [shape: f32[4,1], index: 4, kind: input, shape index: {}]
  %s5 = inlined_call_operand.vmem [shape: f32[4,256], index: 5, kind: input, shape index: {}]
  %s6 = inlined_call_operand.hbm [shape: f32[2,8,256], index: 6, kind: output, shape index: {}]
  %s7 = sld [smem:[#allocation0]]
  $region34: #{tpu_custom_call.1} parent=0
    _
  %s9 = ssub.s32 1, %s7
  %s10 = scalar_select 0, %s9, %s7
  $region1: #{tpu_custom_call.1} parent=0
    #allocation2 [shape = 'u8[16384]{0}', space=vmem, size = 0x4000, scoped, tag = 'output window, operand 0, single buffered']
    #allocation3 [shape = 's32[1]{0}', space=sflag, size = 0x4, scoped, tag = 'scoped memory for tpu_custom_call.1']
    %11 = vsyncpa [#allocation3], 0
    // Predicated region
    $region2: #{tpu_custom_call.1} parent=1 // pred_check
      _
    $region3: #{tpu_custom_call.1} parent=1 // pred_check_branch
      %13 = sbr.rel (0) target = $region5
    $region4: #{tpu_custom_call.1} parent=1 // pred_region
      _
    $region5: #{tpu_custom_call.1} parent=1 // pred_fallthru
      _
    // Predicated region
    $region6: #{tpu_custom_call.1} parent=1 // pred_check
      _
    $region7: #{tpu_custom_call.1} parent=1 // pred_check_branch
      %15 = sbr.rel (0) target = $region9
    $region8: #{tpu_custom_call.1} parent=1 // pred_region
      _
    $region9: #{tpu_custom_call.1} parent=1 // pred_fallthru
      _
    // Predicated region
    $region10: #{tpu_custom_call.1} parent=1 // pred_check
      _
    $region11: #{tpu_custom_call.1} parent=1 // pred_check_branch
      %17 = sbr.rel (0) target = $region13
    $region12: #{tpu_custom_call.1} parent=1 // pred_region
      _
    $region13: #{tpu_custom_call.1} parent=1 // pred_fallthru
      _
    // Predicated region
    $region14: #{tpu_custom_call.1} parent=1 // pred_check
      _
    $region15: #{tpu_custom_call.1} parent=1 // pred_check_branch
      %19 = sbr.rel (0) target = $region17
    $region16: #{tpu_custom_call.1} parent=1 // pred_region
      _
    $region17: #{tpu_custom_call.1} parent=1 // pred_fallthru
      _
    // Predicated region
    $region18: #{tpu_custom_call.1} parent=1 // pred_check
      _
    $region19: #{tpu_custom_call.1} parent=1 // pred_check_branch
      %21 = sbr.rel (0) target = $region21
    $region20: #{tpu_custom_call.1} parent=1 // pred_region
      _
    $region21: #{tpu_custom_call.1} parent=1 // pred_fallthru
      _
    // Predicated region
    $region22: #{tpu_custom_call.1} parent=1 // pred_check
      _
    $region23: #{tpu_custom_call.1} parent=1 // pred_check_branch
      %23 = sbr.rel (0) target = $region25
    $region24: #{tpu_custom_call.1} parent=1 // pred_region
      _
    $region25: #{tpu_custom_call.1} parent=1 // pred_fallthru
      _
    %v24 = vld [vmem:[%s5] sm:$0xff]
    %v25 = vld [vmem:[%s2] sm:$0xf]
    %v26 = vld [vmem:[%s4] sm:$0xf]
    %v27 = vld [vmem:[%s1] sm:$0xf]
    %s28 = scalar_lea.vmem %s1, 4
    %v29 = vld [vmem:[%s28] sm:$0xf]
    %s30 = scalar_lea.vmem %s1, 8
    %v31 = vld [vmem:[%s30] sm:$0xf]
    %s32 = scalar_lea.vmem %s1, 12
    %v33 = vld [vmem:[%s32] sm:$0xf]
    %v34 = vld [vmem:[%s3] sm:$0xf]
    %s35 = scalar_lea.vmem %s3, 4
    %v36 = vld [vmem:[%s35] sm:$0xf]
    %s37 = scalar_lea.vmem %s3, 8
    %v38 = vld [vmem:[%s37] sm:$0xf]
    %s39 = scalar_lea.vmem %s3, 12
    %v40 = vld [vmem:[%s39] sm:$0xf]
    %s41 = scalar_lea.vmem %s3, 16
    %v42 = vld [vmem:[%s41] sm:$0xf]
    %s43 = scalar_lea.vmem %s3, 20
    %v44 = vld [vmem:[%s43] sm:$0xf]
    %s45 = scalar_lea.vmem %s3, 24
    %v46 = vld [vmem:[%s45] sm:$0xf]
    %s47 = scalar_lea.vmem %s3, 28
    %v48 = vld [vmem:[%s47] sm:$0xf]
    %s49 = scalar_lea.vmem %s3, 32
    %v50 = vld [vmem:[%s49] sm:$0xf]
    %v51 = vld [vmem:[%s0] sm:$0xff]
    %53 = vset.pattern.permute.xlu0 0
    %54 = vperm.xlu0 %53, %v27
    %v55 = vpop.permute.xlu0 %54
    %v58 = vlaneseq
    %v59 = vshrl.u32 %v58, 7
    %v60 = vsub.s32 0, %v59
    %v61 = vrot.slane %v51, %v60
    %v62 = vlaneseq
    %v63 = vshrl.u32 %v62, 7
    %v64 = vsub.s32 4, %v63
    %v65 = vrot.slane %v51, %v64
    %v68 = vlaneseq
    %v69 = vshrl.u32 %v68, 7
    %v70 = vsub.s32 0, %v69
    %v71 = vrot.slane %v61, %v70
    %v72 = vlaneseq
    %v73 = vshrl.u32 %v72, 7
    %v74 = vsub.s32 0, %v73
    %v75 = vrot.slane %v65, %v74
    %v76 = vmul.f32 %v55, %v71
    %v77 = vmul.f32 %v55, %v75
    %79 = vset.pattern.permute.xlu0 0
    %80 = vperm.xlu0 %79, %v29
    %v81 = vpop.permute.xlu0 %80
    %v83 = vlaneseq
    %v84 = vshrl.u32 %v83, 7
    %v85 = vsub.s32 1, %v84
    %v86 = vrot.slane %v51, %v85
    %v87 = vlaneseq
    %v88 = vshrl.u32 %v87, 7
    %v89 = vsub.s32 5, %v88
    %v90 = vrot.slane %v51, %v89
    %v93 = vlaneseq
    %v94 = vshrl.u32 %v93, 7
    %v95 = vsub.s32 1, %v94
    %v96 = vrot.slane %v86, %v95
    %v97 = vlaneseq
    %v98 = vshrl.u32 %v97, 7
    %v99 = vsub.s32 1, %v98
    %v100 = vrot.slane %v90, %v99
    %v101 = vmul.f32 %v81, %v96
    %v102 = vmul.f32 %v81, %v100
    %v103 = vadd.f32 %v76, %v101
    %v104 = vadd.f32 %v77, %v102
    %106 = vset.pattern.permute.xlu0 0
    %107 = vperm.xlu0 %106, %v31
    %v108 = vpop.permute.xlu0 %107
    %v110 = vlaneseq
    %v111 = vshrl.u32 %v110, 7
    %v112 = vsub.s32 2, %v111
    %v113 = vrot.slane %v51, %v112
    %v114 = vlaneseq
    %v115 = vshrl.u32 %v114, 7
    %v116 = vsub.s32 6, %v115
    %v117 = vrot.slane %v51, %v116
    %v120 = vlaneseq
    %v121 = vshrl.u32 %v120, 7
    %v122 = vsub.s32 2, %v121
    %v123 = vrot.slane %v113, %v122
    %v124 = vlaneseq
    %v125 = vshrl.u32 %v124, 7
    %v126 = vsub.s32 2, %v125
    %v127 = vrot.slane %v117, %v126
    %v128 = vmul.f32 %v108, %v123
    %v129 = vmul.f32 %v108, %v127
    %v130 = vadd.f32 %v103, %v128
    %v131 = vadd.f32 %v104, %v129
    %133 = vset.pattern.permute.xlu0 0
    %134 = vperm.xlu0 %133, %v33
    %v135 = vpop.permute.xlu0 %134
    %v137 = vlaneseq
    %v138 = vshrl.u32 %v137, 7
    %v139 = vsub.s32 3, %v138
    %v140 = vrot.slane %v51, %v139
    %v141 = vlaneseq
    %v142 = vshrl.u32 %v141, 7
    %v143 = vsub.s32 7, %v142
    %v144 = vrot.slane %v51, %v143
    %v147 = vlaneseq
    %v148 = vshrl.u32 %v147, 7
    %v149 = vsub.s32 3, %v148
    %v150 = vrot.slane %v140, %v149
    %v151 = vlaneseq
    %v152 = vshrl.u32 %v151, 7
    %v153 = vsub.s32 3, %v152
    %v154 = vrot.slane %v144, %v153
    %v155 = vmul.f32 %v135, %v150
    %v156 = vmul.f32 %v135, %v154
    %v157 = vadd.f32 %v130, %v155
    %v158 = vadd.f32 %v131, %v156
    %160 = vset.pattern.permute.xlu0 0
    %161 = vperm.xlu0 %160, %v25
    %v162 = vpop.permute.xlu0 %161
    %v164 = vadd.f32 %v157, %v162
    %v165 = vadd.f32 %v158, %v162
    %v166 = vmax.f32 %v164, 0.0
    %v167 = vmax.f32 %v165, 0.0
    %170 = vrot.lane.b32.xlu0 %v166, 127
    %v171 = vpop.permute.xlu0 %170
    %172 = vrot.lane.b32.xlu0 %v167, 127
    %v173 = vpop.permute.xlu0 %172
    %vm174 = vcmask 1039360
    %v175 = vsel %vm174, %v171, %v173
    %v179 = vsel %vm174, %v173, %v171
    %v181 = vlaneseq
    %v182 = vshrl.u32 %v181, 7
    %v183 = vsub.s32 0, %v182
    %v184 = vrot.slane %v24, %v183
    %v185 = vlaneseq
    %v186 = vshrl.u32 %v185, 7
    %v187 = vsub.s32 4, %v186
    %v188 = vrot.slane %v24, %v187
    %v191 = vlaneseq
    %v192 = vshrl.u32 %v191, 7
    %v193 = vsub.s32 0, %v192
    %v194 = vrot.slane %v184, %v193
    %v195 = vlaneseq
    %v196 = vshrl.u32 %v195, 7
    %v197 = vsub.s32 0, %v196
    %v198 = vrot.slane %v188, %v197
    %v199 = vmul.f32 %v175, %v194
    %v200 = vmul.f32 %v179, %v198
    %201 = vrot.lane.b32.xlu0 %v167, 1
    %v202 = vpop.permute.xlu0 %201
    %204 = vrot.lane.b32.xlu0 %v166, 1
    %v205 = vpop.permute.xlu0 %204
    %vm206 = vcmask 7168
    %v207 = vsel %vm206, %v205, %v202
    %v210 = vsel %vm206, %v202, %v205
    %v211 = vlaneseq
    %v212 = vshrl.u32 %v211, 7
    %v213 = vsub.s32 1, %v212
    %v214 = vrot.slane %v24, %v213
    %v215 = vlaneseq
    %v216 = vshrl.u32 %v215, 7
    %v217 = vsub.s32 5, %v216
    %v218 = vrot.slane %v24, %v217
    %v221 = vlaneseq
    %v222 = vshrl.u32 %v221, 7
    %v223 = vsub.s32 1, %v222
    %v224 = vrot.slane %v214, %v223
    %v225 = vlaneseq
    %v226 = vshrl.u32 %v225, 7
    %v227 = vsub.s32 1, %v226
    %v228 = vrot.slane %v218, %v227
    %v229 = vmul.f32 %v210, %v224
    %v230 = vmul.f32 %v207, %v228
    %232 = vset.pattern.permute.xlu0 0
    %233 = vperm.xlu0 %232, %v40
    %v234 = vpop.permute.xlu0 %233
    %v236 = vmul.f32 %v234, %v229
    %v237 = vmul.f32 %v234, %v230
    %239 = vset.pattern.permute.xlu0 0
    %240 = vperm.xlu0 %239, %v42
    %v241 = vpop.permute.xlu0 %240
    %v243 = vmul.f32 %v241, %v166
    %v244 = vmul.f32 %v241, %v167
    %v245 = vadd.f32 %v236, %v243
    %v246 = vadd.f32 %v237, %v244
    %248 = vset.pattern.permute.xlu0 0
    %249 = vperm.xlu0 %248, %v44
    %v250 = vpop.permute.xlu0 %249
    %v252 = vmul.f32 %v250, %v199
    %v253 = vmul.f32 %v250, %v200
    %v254 = vadd.f32 %v245, %v252
    %v255 = vadd.f32 %v246, %v253
    %257 = vset.pattern.permute.xlu0 0
    %258 = vperm.xlu0 %257, %v34
    %v259 = vpop.permute.xlu0 %258
    %v261 = vmul.f32 %v259, %v229
    %v262 = vmul.f32 %v259, %v230
    %264 = vset.pattern.permute.xlu0 0
    %265 = vperm.xlu0 %264, %v36
    %v266 = vpop.permute.xlu0 %265
    %v268 = vmul.f32 %v266, %v166
    %v269 = vmul.f32 %v266, %v167
    %v270 = vadd.f32 %v261, %v268
    %v271 = vadd.f32 %v262, %v269
    %273 = vset.pattern.permute.xlu0 0
    %274 = vperm.xlu0 %273, %v38
    %v275 = vpop.permute.xlu0 %274
    %v277 = vmul.f32 %v275, %v199
    %v278 = vmul.f32 %v275, %v200
    %v279 = vadd.f32 %v270, %v277
    %v280 = vadd.f32 %v271, %v278
    %282 = vrot.lane.b32.xlu0 %v280, 16
    %v283 = vpop.permute.xlu0 %282
    %286 = vrot.lane.b32.xlu0 %v279, 16
    %v287 = vpop.permute.xlu0 %286
    %vm288 = vcmask 130048
    %v289 = vsel %vm288, %v287, %v283
    %v292 = vsel %vm288, %v283, %v287
    %v293 = vlaneseq
    %v294 = vshrl.u32 %v293, 7
    %v295 = vsub.s32 3, %v294
    %v296 = vrot.slane %v24, %v295
    %v297 = vlaneseq
    %v298 = vshrl.u32 %v297, 7
    %v299 = vsub.s32 7, %v298
    %v300 = vrot.slane %v24, %v299
    %v303 = vlaneseq
    %v304 = vshrl.u32 %v303, 7
    %v305 = vsub.s32 3, %v304
    %v306 = vrot.slane %v296, %v305
    %v307 = vlaneseq
    %v308 = vshrl.u32 %v307, 7
    %v309 = vsub.s32 3, %v308
    %v310 = vrot.slane %v300, %v309
    %v311 = vmul.f32 %v306, %v292
    %v312 = vmul.f32 %v310, %v289
    %v313 = vadd.f32 %v254, %v311
    %v314 = vadd.f32 %v255, %v312
    %316 = vset.pattern.permute.xlu0 0
    %317 = vperm.xlu0 %316, %v46
    %v318 = vpop.permute.xlu0 %317
    %v320 = vmul.f32 %v318, %v229
    %v321 = vmul.f32 %v318, %v230
    %323 = vset.pattern.permute.xlu0 0
    %324 = vperm.xlu0 %323, %v48
    %v325 = vpop.permute.xlu0 %324
    %v327 = vmul.f32 %v325, %v166
    %v328 = vmul.f32 %v325, %v167
    %v329 = vadd.f32 %v320, %v327
    %v330 = vadd.f32 %v321, %v328
    %332 = vset.pattern.permute.xlu0 0
    %333 = vperm.xlu0 %332, %v50
    %v334 = vpop.permute.xlu0 %333
    %v336 = vmul.f32 %v334, %v199
    %v337 = vmul.f32 %v334, %v200
    %v338 = vadd.f32 %v329, %v336
    %v339 = vadd.f32 %v330, %v337
    %342 = vrot.lane.b32.xlu0 %v338, 112
    %v343 = vpop.permute.xlu0 %342
    %344 = vrot.lane.b32.xlu0 %v339, 112
    %v345 = vpop.permute.xlu0 %344
    %vm346 = vcmask 916480
    %v347 = vsel %vm346, %v343, %v345
    %v351 = vsel %vm346, %v345, %v343
    %v352 = vlaneseq
    %v353 = vshrl.u32 %v352, 7
    %v354 = vsub.s32 2, %v353
    %v355 = vrot.slane %v24, %v354
    %v356 = vlaneseq
    %v357 = vshrl.u32 %v356, 7
    %v358 = vsub.s32 6, %v357
    %v359 = vrot.slane %v24, %v358
    %v362 = vlaneseq
    %v363 = vshrl.u32 %v362, 7
    %v364 = vsub.s32 2, %v363
    %v365 = vrot.slane %v355, %v364
    %v366 = vlaneseq
    %v367 = vshrl.u32 %v366, 7
    %v368 = vsub.s32 2, %v367
    %v369 = vrot.slane %v359, %v368
    %v370 = vmul.f32 %v365, %v347
    %v371 = vmul.f32 %v369, %v351
    %v372 = vadd.f32 %v313, %v370
    %v373 = vadd.f32 %v314, %v371
    %375 = vset.pattern.permute.xlu0 0
    %376 = vperm.xlu0 %375, %v26
    %v377 = vpop.permute.xlu0 %376
    %v379 = vadd.f32 %v372, %v377
    %v380 = vadd.f32 %v373, %v377
    %v381 = vmax.f32 %v379, 0.0
    %v382 = vmax.f32 %v380, 0.0
    %383 = vst [vmem:[#allocation2] sm:$0xf] %v166
    %384 = vst [vmem:[#allocation2 + $0x8] sm:$0xf] %v167
    %v387 = vrot.slane %v381, 4
    %v388 = vrot.slane %v382, 4
    %391 = vst [vmem:[#allocation2] sm:$0xf0] %v387
    %392 = vst [vmem:[#allocation2 + $0x8] sm:$0xf0] %v388
    %s393 = scalar_lea.vmem %s0, 8
    %v394 = vld [vmem:[%s393] sm:$0xff]
    %v396 = vlaneseq
    %v397 = vshrl.u32 %v396, 7
    %v398 = vsub.s32 0, %v397
    %v399 = vrot.slane %v394, %v398
    %v400 = vlaneseq
    %v401 = vshrl.u32 %v400, 7
    %v402 = vsub.s32 4, %v401
    %v403 = vrot.slane %v394, %v402
    %v406 = vlaneseq
    %v407 = vshrl.u32 %v406, 7
    %v408 = vsub.s32 0, %v407
    %v409 = vrot.slane %v399, %v408
    %v410 = vlaneseq
    %v411 = vshrl.u32 %v410, 7
    %v412 = vsub.s32 0, %v411
    %v413 = vrot.slane %v403, %v412
    %v414 = vmul.f32 %v55, %v409
    %v415 = vmul.f32 %v55, %v413
    %v416 = vlaneseq
    %v417 = vshrl.u32 %v416, 7
    %v418 = vsub.s32 1, %v417
    %v419 = vrot.slane %v394, %v418
    %v420 = vlaneseq
    %v421 = vshrl.u32 %v420, 7
    %v422 = vsub.s32 5, %v421
    %v423 = vrot.slane %v394, %v422
    %v426 = vlaneseq
    %v427 = vshrl.u32 %v426, 7
    %v428 = vsub.s32 1, %v427
    %v429 = vrot.slane %v419, %v428
    %v430 = vlaneseq
    %v431 = vshrl.u32 %v430, 7
    %v432 = vsub.s32 1, %v431
    %v433 = vrot.slane %v423, %v432
    %v434 = vmul.f32 %v81, %v429
    %v435 = vmul.f32 %v81, %v433
    %v436 = vadd.f32 %v414, %v434
    %v437 = vadd.f32 %v415, %v435
    %v438 = vlaneseq
    %v439 = vshrl.u32 %v438, 7
    %v440 = vsub.s32 2, %v439
    %v441 = vrot.slane %v394, %v440
    %v442 = vlaneseq
    %v443 = vshrl.u32 %v442, 7
    %v444 = vsub.s32 6, %v443
    %v445 = vrot.slane %v394, %v444
    %v448 = vlaneseq
    %v449 = vshrl.u32 %v448, 7
    %v450 = vsub.s32 2, %v449
    %v451 = vrot.slane %v441, %v450
    %v452 = vlaneseq
    %v453 = vshrl.u32 %v452, 7
    %v454 = vsub.s32 2, %v453
    %v455 = vrot.slane %v445, %v454
    %v456 = vmul.f32 %v108, %v451
    %v457 = vmul.f32 %v108, %v455
    %v458 = vadd.f32 %v436, %v456
    %v459 = vadd.f32 %v437, %v457
    %v460 = vlaneseq
    %v461 = vshrl.u32 %v460, 7
    %v462 = vsub.s32 3, %v461
    %v463 = vrot.slane %v394, %v462
    %v464 = vlaneseq
    %v465 = vshrl.u32 %v464, 7
    %v466 = vsub.s32 7, %v465
    %v467 = vrot.slane %v394, %v466
    %v470 = vlaneseq
    %v471 = vshrl.u32 %v470, 7
    %v472 = vsub.s32 3, %v471
    %v473 = vrot.slane %v463, %v472
    %v474 = vlaneseq
    %v475 = vshrl.u32 %v474, 7
    %v476 = vsub.s32 3, %v475
    %v477 = vrot.slane %v467, %v476
    %v478 = vmul.f32 %v135, %v473
    %v479 = vmul.f32 %v135, %v477
    %v480 = vadd.f32 %v458, %v478
    %v481 = vadd.f32 %v459, %v479
    %v482 = vadd.f32 %v480, %v162
    %v483 = vadd.f32 %v481, %v162
    %v484 = vmax.f32 %v482, 0.0
    %v485 = vmax.f32 %v483, 0.0
    %488 = vrot.lane.b32.xlu0 %v484, 127
    %v489 = vpop.permute.xlu0 %488
    %490 = vrot.lane.b32.xlu0 %v485, 127
    %v491 = vpop.permute.xlu0 %490
    %v492 = vsel %vm174, %v489, %v491
    %v496 = vsel %vm174, %v491, %v489
    %v497 = vmul.f32 %v492, %v194
    %v498 = vmul.f32 %v496, %v198
    %499 = vrot.lane.b32.xlu0 %v485, 1
    %v500 = vpop.permute.xlu0 %499
    %502 = vrot.lane.b32.xlu0 %v484, 1
    %v503 = vpop.permute.xlu0 %502
    %v504 = vsel %vm206, %v503, %v500
    %v507 = vsel %vm206, %v500, %v503
    %v508 = vmul.f32 %v507, %v224
    %v509 = vmul.f32 %v504, %v228
    %v510 = vmul.f32 %v234, %v508
    %v511 = vmul.f32 %v234, %v509
    %v512 = vmul.f32 %v241, %v484
    %v513 = vmul.f32 %v241, %v485
    %v514 = vadd.f32 %v510, %v512
    %v515 = vadd.f32 %v511, %v513
    %v516 = vmul.f32 %v250, %v497
    %v517 = vmul.f32 %v250, %v498
    %v518 = vadd.f32 %v514, %v516
    %v519 = vadd.f32 %v515, %v517
    %v520 = vmul.f32 %v259, %v508
    %v521 = vmul.f32 %v259, %v509
    %v522 = vmul.f32 %v266, %v484
    %v523 = vmul.f32 %v266, %v485
    %v524 = vadd.f32 %v520, %v522
    %v525 = vadd.f32 %v521, %v523
    %v526 = vmul.f32 %v275, %v497
    %v527 = vmul.f32 %v275, %v498
    %v528 = vadd.f32 %v524, %v526
    %v529 = vadd.f32 %v525, %v527
    %531 = vrot.lane.b32.xlu0 %v529, 16
    %v532 = vpop.permute.xlu0 %531
    %535 = vrot.lane.b32.xlu0 %v528, 16
    %v536 = vpop.permute.xlu0 %535
    %v537 = vsel %vm288, %v536, %v532
    %v540 = vsel %vm288, %v532, %v536
    %v541 = vmul.f32 %v306, %v540
    %v542 = vmul.f32 %v310, %v537
    %v543 = vadd.f32 %v518, %v541
    %v544 = vadd.f32 %v519, %v542
    %v545 = vmul.f32 %v318, %v508
    %v546 = vmul.f32 %v318, %v509
    %v547 = vmul.f32 %v325, %v484
    %v548 = vmul.f32 %v325, %v485
    %v549 = vadd.f32 %v545, %v547
    %v550 = vadd.f32 %v546, %v548
    %v551 = vmul.f32 %v334, %v497
    %v552 = vmul.f32 %v334, %v498
    %v553 = vadd.f32 %v549, %v551
    %v554 = vadd.f32 %v550, %v552
    %557 = vrot.lane.b32.xlu0 %v553, 112
    %v558 = vpop.permute.xlu0 %557
    %559 = vrot.lane.b32.xlu0 %v554, 112
    %v560 = vpop.permute.xlu0 %559
    %v561 = vsel %vm346, %v558, %v560
    %v565 = vsel %vm346, %v560, %v558
    %v566 = vmul.f32 %v365, %v561
    %v567 = vmul.f32 %v369, %v565
    %v568 = vadd.f32 %v543, %v566
    %v569 = vadd.f32 %v544, %v567
    %v570 = vadd.f32 %v568, %v377
    %v571 = vadd.f32 %v569, %v377
    %v572 = vmax.f32 %v570, 0.0
    %v573 = vmax.f32 %v571, 0.0
    %s574 = scalar_lea.vmem [#allocation2], 16
    %575 = vst [vmem:[%s574] sm:$0xf] %v484
    %576 = vst [vmem:[%s574 + $0x8] sm:$0xf] %v485
    %v579 = vrot.slane %v572, 4
    %v580 = vrot.slane %v573, 4
    %583 = vst [vmem:[%s574] sm:$0xf0] %v579
    %584 = vst [vmem:[%s574 + $0x8] sm:$0xf0] %v580
    // Predicated region
    $region26: #{tpu_custom_call.1} parent=1 // pred_check
      _
    $region27: #{tpu_custom_call.1} parent=1 // pred_check_branch
      %586 = sbr.rel (0) target = $region29
    $region28: #{tpu_custom_call.1} parent=1 // pred_region
      %s588 = ssub.s32 512, 512
      %589 = vsyncadd [#allocation3], %s588
      %s590 = sshll.u32 [#allocation2], 4
      %s591 = int_to_ptr.vmem [resolvable:$true] %s590
      %596 = dma.vmem_to_hbm [thread:$0]  %s591, 512, %s6, [#allocation3], 256, 256, 16
    $region29: #{tpu_custom_call.1} parent=1 // pred_fallthru
      _
    // Predicated region
    $region30: #{tpu_custom_call.1} parent=1 // pred_check
      _
    $region31: #{tpu_custom_call.1} parent=1 // pred_check_branch
      %598 = sbr.rel (0) target = $region33
    $region32: #{tpu_custom_call.1} parent=1 // pred_region
      %599 = dma.done [#allocation3], 512
    $region33: #{tpu_custom_call.1} parent=1 // pred_fallthru
      _
    %600 = vsyncpa [#allocation3], 1

</llo_original>
